<compile_context>
chip_gen: v7x
topology: tpu7x:2x2x1
jax: 0.10.0
libtpu: 0.0.40
codegen_flags: <defaults>
</compile_context>

<pallas_src>
import functools

import jax
import jax.numpy as jnp
from jax.experimental import pallas as pl
from jax.experimental.pallas import tpu as pltpu

VOCAB = 32       # MyDataset.len_vocab() -- synthetic choice
HIDDEN = 5
OUT = 14
OUT_PAD = 128    # lane-dense width used only for the in-VMEM compute
BATCH = 8
TILE_B = 2048    # batch tile for the gridded path


def fused_mlp_softmax_kernel(x_ref, w_ref, b_ref, o_ref):
    # x: (tb, V)  w: (V, OUT_PAD)  b: (1, OUT_PAD)  o: (tb, OUT)
    logits = jnp.dot(x_ref[...], w_ref[...],
                     preferred_element_type=jnp.float32) + b_ref[...]
    # Padded lanes carry bias = -1e30 -> exp underflows to exactly 0 after the
    # max subtraction, so softmax over 128 lanes == softmax over the real 14.
    m = jnp.max(logits, axis=1, keepdims=True)
    e = jnp.exp(logits - m)
    denom = jnp.sum(e, axis=1, keepdims=True)
    probs = e / denom                      # exact divide: rows sum to 1
    o_ref[...] = probs[:, :OUT].astype(o_ref.dtype)


def fuse_params(w1, b1, w2, b2):
    """Exact algebraic fusion of the two Linears (no activation in between).
    Call once per weight set; result is reused across forward calls."""
    W = w1 @ w2                            # (V, OUT)
    b = b1 @ w2 + b2                       # (1, OUT)
    V = W.shape[0]
    W_pad = jnp.zeros((V, OUT_PAD), jnp.float32).at[:, :OUT].set(W)
    b_pad = jnp.full((1, OUT_PAD), -1e30, jnp.float32).at[:, :OUT].set(b)
    return W_pad, b_pad


def _choose_tile(B, tile_b):
    """Pick a batch tile so the grid has an even number (>=2) of steps when
    tiled (v7x has 2 TensorCores sharing 'parallel' grid axes)."""
    n = -(-B // tile_b)
    if n % 2 == 1:
        n_even = n + 1
        tile = -(-B // n_even)
        tile = max(8, ((tile + 7) // 8) * 8)
        return tile
    return tile_b


def _cost_estimate(B, V):
    return pl.CostEstimate(
        flops=2 * B * V * OUT_PAD,
        transcendentals=B * OUT_PAD,
        bytes_accessed=4 * (B * V + V * OUT_PAD + OUT_PAD + B * OUT),
    )


@functools.partial(jax.jit, static_argnames=("tile_b",))
def model_forward(x, W_pad, b_pad, *, tile_b=TILE_B):
    B, V = x.shape

    if B <= tile_b:
        # Small batch: single whole-array VMEM block, no grid / pipeline overhead.
        return pl.pallas_call(
            fused_mlp_softmax_kernel,
            out_shape=jax.ShapeDtypeStruct((B, OUT), jnp.float32),
            in_specs=[
                pl.BlockSpec(memory_space=pltpu.MemorySpace.VMEM),
                pl.BlockSpec(memory_space=pltpu.MemorySpace.VMEM),
                pl.BlockSpec(memory_space=pltpu.MemorySpace.VMEM),
            ],
            out_specs=pl.BlockSpec(memory_space=pltpu.MemorySpace.VMEM),
            cost_estimate=_cost_estimate(B, V),
        )(x, W_pad, b_pad)

    # Large batch: tile over rows; no padding of x needed -- Pallas handles the
    # partial last block (writes past B are discarded).
    tile = _choose_tile(B, tile_b)
    n_tiles = pl.cdiv(B, tile)
    return pl.pallas_call(
        fused_mlp_softmax_kernel,
        out_shape=jax.ShapeDtypeStruct((B, OUT), jnp.float32),
        grid=(n_tiles,),
        in_specs=[
            pl.BlockSpec((tile, V), lambda i: (i, 0)),
            pl.BlockSpec((V, OUT_PAD), lambda i: (0, 0)),
            pl.BlockSpec((1, OUT_PAD), lambda i: (0, 0)),
        ],
        out_specs=pl.BlockSpec((tile, OUT), lambda i: (i, 0)),
        compiler_params=pltpu.CompilerParams(
            dimension_semantics=("parallel",)),
        cost_estimate=_cost_estimate(B, V),
    )(x, W_pad, b_pad)


def init_params(key):
    # Deterministic init mimicking nn.Linear's U(-1/sqrt(fan_in), 1/sqrt(fan_in))
    k1, k2, k3, k4 = jax.random.split(key, 4)
    lim1 = 1.0 / jnp.sqrt(VOCAB)
    lim2 = 1.0 / jnp.sqrt(HIDDEN)
    w1 = jax.random.uniform(k1, (VOCAB, HIDDEN), jnp.float32, -lim1, lim1)
    b1 = jax.random.uniform(k2, (1, HIDDEN), jnp.float32, -lim1, lim1)
    w2 = jax.random.uniform(k3, (HIDDEN, OUT), jnp.float32, -lim2, lim2)
    b2 = jax.random.uniform(k4, (1, OUT), jnp.float32, -lim2, lim2)
    return w1, b1, w2, b2


if __name__ == "__main__":
    key = jax.random.PRNGKey(0)
    kx, kp = jax.random.split(key)
    w1, b1, w2, b2 = init_params(kp)

    # Fuse/pad the weights ONCE (hoisted out of the per-call path).
    W_pad, b_pad = fuse_params(w1, b1, w2, b2)

    # 1) small-batch (no-grid) path
    x = jax.random.normal(kx, (BATCH, VOCAB), jnp.float32)
    out = jax.block_until_ready(model_forward(x, W_pad, b_pad))
    ref = jax.nn.softmax((x @ w1 + b1) @ w2 + b2, axis=1)
    assert out.shape == (BATCH, OUT)
    assert jnp.allclose(out, ref, atol=2e-3, rtol=2e-3)
    assert jnp.allclose(jnp.sum(out, axis=1), 1.0, atol=1e-3)

    # 2) gridded path with a ragged batch (exercises partial last block);
    #    small tile override keeps the test shape small.
    xb = jax.random.normal(jax.random.PRNGKey(1), (300, VOCAB), jnp.float32)
    outb = jax.block_until_ready(model_forward(xb, W_pad, b_pad, tile_b=128))
    refb = jax.nn.softmax((xb @ w1 + b1) @ w2 + b2, axis=1)
    assert outb.shape == (300, OUT)
    assert jnp.allclose(outb, refb, atol=2e-3, rtol=2e-3)
    assert jnp.allclose(jnp.sum(outb, axis=1), 1.0, atol=1e-3)

    print("KERNEL_OK")
</pallas_src>

<mosaic_0001>
module attributes {stable_mosaic.version = 11 : i64} {
  func.func @fused_mlp_softmax_kernel(%arg0: memref<8x32xf32, #tpu.memory_space<vmem>>, %arg1: memref<32x128xf32, #tpu.memory_space<vmem>>, %arg2: memref<1x128xf32, #tpu.memory_space<vmem>>, %arg3: memref<8x14xf32, #tpu.memory_space<vmem>>) attributes {dimension_semantics = [], scalar_prefetch = 0 : i64, scratch_operands = 0 : i64, tpu.core_type = #tpu.core_type<tc>} {
    %c0 = arith.constant 0 : index
    %c0_0 = arith.constant 0 : index
    %0 = vector.load %arg0[%c0, %c0_0] : memref<8x32xf32, #tpu.memory_space<vmem>>, vector<8x32xf32>
    %c0_1 = arith.constant 0 : index
    %c0_2 = arith.constant 0 : index
    %1 = vector.load %arg1[%c0_1, %c0_2] : memref<32x128xf32, #tpu.memory_space<vmem>>, vector<32x128xf32>
    %cst = arith.constant dense<0.000000e+00> : vector<8x128xf32>
    %2 = tpu.matmul %0, %1, %cst {dimension_numbers = #tpu.dot_dimension_numbers<[1], [0], [0], [1], [0, 0, 1, 1], [], []>} : vector<8x32xf32>, vector<32x128xf32>, vector<8x128xf32> -> vector<8x128xf32>
    %c0_3 = arith.constant 0 : index
    %c0_4 = arith.constant 0 : index
    %3 = vector.load %arg2[%c0_3, %c0_4] : memref<1x128xf32, #tpu.memory_space<vmem>>, vector<1x128xf32>
    %4 = vector.broadcast %3 : vector<1x128xf32> to vector<8x128xf32>
    %5 = arith.addf %2, %4 : vector<8x128xf32>
    %cst_5 = arith.constant dense<0xFF800000> : vector<8xf32>
    %6 = vector.multi_reduction <maximumf>, %5, %cst_5 [1] : vector<8x128xf32> to vector<8xf32>
    %7 = vector.shape_cast %6 : vector<8xf32> to vector<8x1xf32>
    %8 = vector.broadcast %7 : vector<8x1xf32> to vector<8x128xf32>
    %9 = arith.subf %5, %8 : vector<8x128xf32>
    %10 = math.exp %9 : vector<8x128xf32>
    %cst_6 = arith.constant dense<0.000000e+00> : vector<8xf32>
    %11 = vector.multi_reduction <add>, %10, %cst_6 [1] : vector<8x128xf32> to vector<8xf32>
    %12 = vector.shape_cast %11 : vector<8xf32> to vector<8x1xf32>
    %13 = vector.broadcast %12 : vector<8x1xf32> to vector<8x128xf32>
    %14 = arith.divf %10, %13 : vector<8x128xf32>
    %15 = vector.extract_strided_slice %14 {offsets = [0, 0], sizes = [8, 14], strides = [1, 1]} : vector<8x128xf32> to vector<8x14xf32>
    %c0_7 = arith.constant 0 : index
    %c0_8 = arith.constant 0 : index
    %16 = vector.load %arg3[%c0_7, %c0_8] : memref<8x14xf32, #tpu.memory_space<vmem>>, vector<8x14xf32>
    tpu.vector_store %arg3[%c0_7, %c0_8], %15 {strides = array<i32>} : memref<8x14xf32, #tpu.memory_space<vmem>>, vector<8x14xf32>,
    return
  }
}

</mosaic_0001>

<llo_original>
// kernel: model_forward.1
$region0: #{model_forward.1}
  #allocation0 [shape = 'u32[]', space=smem, size = 0x4, offset = 0x4, fixed_abs, tag = 'smem constant byte address 0x4 - core index']
  #allocation1 [shape = 'u32[144,128]{1,0:T(1,128)}', space=vmem, size = 0x12000, scoped, tag = 'internal scratch']
  %s0 = inlined_call_operand.hbm [shape: f32[8,32], index: 0, kind: input, shape index: {}]
  %s1 = inlined_call_operand.hbm [shape: f32[32,128], index: 1, kind: input, shape index: {}]
  %s2 = inlined_call_operand.vmem [shape: f32[1,128], index: 2, kind: input, shape index: {}]
  %s3 = inlined_call_operand.hbm [shape: f32[8,14], index: 3, kind: output, shape index: {}]
  %s4 = sld [smem:[#allocation0]]
  $region30: #{model_forward.1} parent=0
    _
  %s6 = ssub.s32 1, %s4
  %s7 = scalar_select 0, %s6, %s4
  $region1: #{model_forward.1} parent=0
    #allocation2 [shape = 'u8[4096]{0}', space=vmem, size = 0x1000, scoped, tag = 'input window, operand 0, single buffered']
    #allocation3 [shape = 's32[1]{0}', space=sflag, size = 0x4, scoped, tag = 'scoped memory for model_forward.1']
    #allocation4 [shape = 's32[1]{0}', space=sflag, size = 0x4, scoped, tag = 'scoped memory for model_forward.1']
    #allocation5 [shape = 'u8[16384]{0}', space=vmem, size = 0x4000, scoped, tag = 'input window, operand 1, single buffered']
    #allocation6 [shape = 's32[1]{0}', space=sflag, size = 0x4, scoped, tag = 'scoped memory for model_forward.1']
    #allocation7 [shape = 'u8[4096]{0}', space=vmem, size = 0x1000, scoped, tag = 'output window, operand 0, single buffered']
    %8 = vsyncpa [#allocation3], 0
    %9 = vsyncpa [#allocation6], 0
    %10 = vsyncpa [#allocation4], 0
    // Predicated region
    $region2: #{model_forward.1} parent=1 // pred_check
      _
    $region3: #{model_forward.1} parent=1 // pred_check_branch
      %12 = sbr.rel (0) target = $region5
    $region4: #{model_forward.1} parent=1 // pred_region
      %s14 = ssub.s32 128, 128
      %15 = vsyncadd [#allocation3], %s14
      %s17 = sshll.u32 [#allocation2], 4
      %s18 = int_to_ptr.vmem [resolvable:$true] %s17
      %20 = dma.hbm_to_vmem [thread:$0]  %s0, 128, %s18, [#allocation3]
    $region5: #{model_forward.1} parent=1 // pred_fallthru
      _
    // Predicated region
    $region6: #{model_forward.1} parent=1 // pred_check
      _
    $region7: #{model_forward.1} parent=1 // pred_check_branch
      %22 = sbr.rel (0) target = $region9
    $region8: #{model_forward.1} parent=1 // pred_region
      %s24 = ssub.s32 512, 512
      %25 = vsyncadd [#allocation6], %s24
      %s26 = sshll.u32 [#allocation5], 4
      %s27 = int_to_ptr.vmem [resolvable:$true] %s26
      %32 = dma.hbm_to_vmem [thread:$0]  %s1, 512, %s27, [#allocation6], 128, 128, 8
    $region9: #{model_forward.1} parent=1 // pred_fallthru
      _
    // Predicated region
    $region10: #{model_forward.1} parent=1 // pred_check
      _
    $region11: #{model_forward.1} parent=1 // pred_check_branch
      %34 = sbr.rel (0) target = $region13
    $region12: #{model_forward.1} parent=1 // pred_region
      _
    $region13: #{model_forward.1} parent=1 // pred_fallthru
      _
    // Predicated region
    $region14: #{model_forward.1} parent=1 // pred_check
      _
    $region15: #{model_forward.1} parent=1 // pred_check_branch
      %36 = sbr.rel (0) target = $region17
    $region16: #{model_forward.1} parent=1 // pred_region
      %37 = dma.done [#allocation3], 128
    $region17: #{model_forward.1} parent=1 // pred_fallthru
      _
    // Predicated region
    $region18: #{model_forward.1} parent=1 // pred_check
      _
    $region19: #{model_forward.1} parent=1 // pred_check_branch
      %39 = sbr.rel (0) target = $region21
    $region20: #{model_forward.1} parent=1 // pred_region
      %40 = dma.done [#allocation6], 512
    $region21: #{model_forward.1} parent=1 // pred_fallthru
      _
    %v41 = vld [vmem:[#allocation2] sm:$0xff]
    %v42 = vld [vmem:[#allocation5] sm:$0xff]
    %v43 = vld [vmem:[#allocation5 + $0x8] sm:$0xff]
    %v44 = vld [vmem:[#allocation5 + $0x10] sm:$0xff]
    %v45 = vld [vmem:[#allocation5 + $0x18] sm:$0xff]
    %v46 = vld [vmem:[%s2] sm:$0x1]
    %v48 = vlaneseq
    %v49 = vshrl.u32 %v48, 7
    %v50 = vsub.s32 0, %v49
    %v51 = vrot.slane %v46, %v50
    %vm53 = vcmask 261120
    %v55 = vsel %vm53, %v41, 0
    %57 = vmatprep.subr.mxu0 0.0
    %58 = vmatpush1.msra.mxu0 %v42
    %59 = vmatprep.subr.mxu0 0.0
    %60 = vmatpush1.msra.mxu0 %v43
    %61 = vmatprep.subr.mxu0 0.0
    %62 = vmatpush1.msra.mxu0 %v44
    %63 = vmatprep.subr.mxu0 0.0
    %64 = vmatpush1.msra.mxu0 %v45
    %65 = vmatprep.subr.mxu0 0.0
    %66 = vmatpush1.msra.mxu0 0.0
    %67 = vmatprep.subr.mxu0 0.0
    %68 = vmatpush1.msra.mxu0 0.0
    %69 = vmatprep.subr.mxu0 0.0
    %70 = vmatpush1.msra.mxu0 0.0
    %71 = vmatprep.subr.mxu0 0.0
    %72 = vmatpush1.msra.mxu0 0.0
    %73 = vmatprep.subr.mxu0 0.0
    %74 = vmatpush1.msra.mxu0 0.0
    %75 = vmatprep.subr.mxu0 0.0
    %76 = vmatpush1.msra.mxu0 0.0
    %77 = vmatprep.subr.mxu0 0.0
    %78 = vmatpush1.msra.mxu0 0.0
    %79 = vmatprep.subr.mxu0 0.0
    %80 = vmatpush1.msra.mxu0 0.0
    %81 = vmatprep.subr.mxu0 0.0
    %82 = vmatpush1.msra.mxu0 0.0
    %83 = vmatprep.subr.mxu0 0.0
    %84 = vmatpush1.msra.mxu0 0.0
    %85 = vmatprep.subr.mxu0 0.0
    %86 = vmatpush1.msra.mxu0 0.0
    %87 = vmatprep.subr.mxu0 0.0
    %88 = vmatpush1.msra.mxu0 0.0
    %89 = vmatprep.subr.mxu0 0.0
    %90 = vmatpush1.msra.mxu0 0.0
    %91 = vmatprep.subr.mxu0 0.0
    %92 = vmatpush1.msra.mxu0 0.0
    %93 = vmatprep.subr.mxu0 0.0
    %94 = vmatpush1.msra.mxu0 0.0
    %95 = vmatprep.subr.mxu0 0.0
    %96 = vmatpush1.msra.mxu0 0.0
    %97 = vmatprep.subr.mxu0 0.0
    %98 = vmatpush1.msra.mxu0 0.0
    %99 = vmatprep.subr.mxu0 0.0
    %100 = vmatpush1.msra.mxu0 0.0
    %101 = vmatprep.subr.mxu0 0.0
    %102 = vmatpush1.msra.mxu0 0.0
    %103 = vmatprep.subr.mxu0 0.0
    %104 = vmatpush1.msra.mxu0 0.0
    %105 = vmatprep.subr.mxu0 0.0
    %106 = vmatpush1.msra.mxu0 0.0
    %107 = vmatprep.subr.mxu0 0.0
    %108 = vmatpush1.msra.mxu0 0.0
    %109 = vmatprep.subr.mxu0 0.0
    %110 = vmatpush1.msra.mxu0 0.0
    %111 = vmatprep.subr.mxu0 0.0
    %112 = vmatpush1.msra.mxu0 0.0
    %113 = vmatprep.subr.mxu0 0.0
    %114 = vmatpush1.msra.mxu0 0.0
    %115 = vmatprep.subr.mxu0 0.0
    %116 = vmatpush1.msra.mxu0 0.0
    %117 = vmatprep.subr.mxu0 0.0
    %118 = vmatpush1.msra.mxu0 0.0
    %119 = vmatprep.subr.mxu0 0.0
    %120 = vmatpush1.msra.mxu0 0.0
    %121 = vmatprep.mubr.f32.mxu0 0.0
    %122 = vmatmul.mubr.f32.gmra.mrb[0].mxu0 %v55
    %v123 = vpop.f32.mrb[0].mxu0
    %v124 = vadd.f32 %v51, %v123
    %v125 = vpop.f32.mrb[0].mxu0
    %126 = vdwg.mxu0
    %127 = vmax.xlane.f32.xlu0 %v124
    %v128 = vpop.xlane.xlu0 %127
    %v129 = vsub.f32 %v124, %v128
    %v130 = vmul.f32 %v129, 1.442695
    %v131 = vpow.pop %v130
    %132 = vadd.xlane.f32.xlu0 %v131
    %v133 = vpop.xlane.xlu0 %132
    %v134 = vrcp.pop %v133
    %v135 = vmul.f32 %v131, %v134
    %vm136 = vcmask 113664
    %137 = vst.msk [vmem:[#allocation7] sm:$0xff] %vm136, %v135
    // Predicated region
    $region22: #{model_forward.1} parent=1 // pred_check
      _
    $region23: #{model_forward.1} parent=1 // pred_check_branch
      %139 = sbr.rel (0) target = $region25
    $region24: #{model_forward.1} parent=1 // pred_region
      %s141 = ssub.s32 128, 128
      %142 = vsyncadd [#allocation4], %s141
      %s144 = sshll.u32 [#allocation7], 4
      %s145 = int_to_ptr.vmem [resolvable:$true] %s144
      %147 = dma.vmem_to_hbm [thread:$0]  %s145, 128, %s3, [#allocation4]
    $region25: #{model_forward.1} parent=1 // pred_fallthru
      _
    // Predicated region
    $region26: #{model_forward.1} parent=1 // pred_check
      _
    $region27: #{model_forward.1} parent=1 // pred_check_branch
      %149 = sbr.rel (0) target = $region29
    $region28: #{model_forward.1} parent=1 // pred_region
      %150 = dma.done [#allocation4], 128
    $region29: #{model_forward.1} parent=1 // pred_fallthru
      _
    %151 = vsyncpa [#allocation3], 1
    %152 = vsyncpa [#allocation6], 1
    %153 = vsyncpa [#allocation4], 1

</llo_original>
